<compile_context>
chip_gen: v5e
topology: v5e:2x2
jax: 0.10.0
libtpu: 0.0.40
codegen_flags: <defaults>
</compile_context>

<pallas_src>
import math
import functools

import jax
import jax.numpy as jnp
from jax.experimental import pallas as pl
from jax.experimental.pallas import tpu as pltpu

EPS = 1e-6  # norm_layer = partial(nn.LayerNorm, eps=1e-6)


# ----------------------------------------------------------------------------
# In-kernel helpers
# ----------------------------------------------------------------------------
def _layernorm(x, g, b):
    mu = jnp.mean(x, axis=-1, keepdims=True)
    var = jnp.mean((x - mu) ** 2, axis=-1, keepdims=True)
    return (x - mu) * jax.lax.rsqrt(var + EPS) * g + b


def _erf_approx(x):
    # Abramowitz & Stegun 7.1.26 polynomial (|err| < 1.5e-7 with exact divide).
    # TODO(synk): Mosaic has no native erf lowering; exact-GELU erf is
    # approximated here (exact divide, per the correctness review).
    s = jnp.sign(x)
    a = jnp.abs(x)
    t = 1.0 / (1.0 + 0.3275911 * a)
    poly = ((((1.061405429 * t - 1.453152027) * t + 1.421413741) * t
             - 0.284496736) * t + 0.254829592) * t
    return s * (1.0 - poly * jnp.exp(-a * a))


def _gelu_exact(x):
    return 0.5 * x * (1.0 + _erf_approx(x * (1.0 / math.sqrt(2.0))))


# ----------------------------------------------------------------------------
# Kernel 1: patch embedding + token assembly.
# grid = (batch_blocks,).  Writes a pre-padded (Bt, Sp, D) bf16 token block:
#   row 0      = class_token + pos[0]
#   rows 1..S  = patch_embed + pos[1:]
#   rows S..Sp = 0
# ----------------------------------------------------------------------------
def patch_embed_kernel(p_ref, w_ref, b_ref, cls_ref, pc_ref, pp_ref, tok_ref,
                       *, bt, seq0, seq_pad):
    P = p_ref.shape[-1]
    D = tok_ref.shape[-1]
    emb = jnp.dot(p_ref[...].reshape(bt * seq0, P), w_ref[...],
                  preferred_element_type=jnp.float32) + b_ref[...]
    emb = emb.reshape(bt, seq0, D) + pp_ref[...][None]          # + pos[1:]
    cls_tok = cls_ref[...] + pc_ref[...]                        # (1, D)

    if seq_pad > 1 + seq0:                                      # zero pad rows
        tok_ref[:, 1 + seq0:, :] = jnp.zeros(
            (bt, seq_pad - 1 - seq0, D), tok_ref.dtype)
    tok_ref[:, 0:1, :] = jnp.broadcast_to(
        cls_tok[None], (bt, 1, D)).astype(tok_ref.dtype)
    tok_ref[:, 1:1 + seq0, :] = emb.astype(tok_ref.dtype)


# ----------------------------------------------------------------------------
# Kernel 2: one encoder layer per grid step; grid = (batch_blocks, num_layers).
# Per-layer weights are streamed (one layer resident, double-buffered); the
# token state is a VMEM scratch carried across the layer axis.
# ----------------------------------------------------------------------------
def encoder_layer_kernel(tok_ref,
                         ln1g_ref, ln1b_ref, wqkv_ref, bqkv_ref,
                         wout_ref, bout_ref, ln2g_ref, ln2b_ref,
                         w1_ref, b1_ref, w2_ref, b2_ref,
                         lnfg_ref, lnfb_ref,
                         o_ref, x_sc,
                         *, num_heads, seq_pad, seq_real, bt, mlp_chunk):
    l = pl.program_id(1)
    num_layers = pl.num_programs(1)
    D = o_ref.shape[-1]
    H = num_heads
    dh = D // H
    M = w1_ref.shape[-1]
    mc = mlp_chunk
    n_mc = M // mc
    bf = jnp.bfloat16
    f32 = jnp.float32
    scale = 1.0 / math.sqrt(dh)

    # Initialise the residual stream from the pre-assembled tokens at layer 0.
    @pl.when(l == 0)
    def _():
        x_sc[...] = tok_ref[...].astype(f32).reshape(bt * seq_pad, D)

    x = x_sc[...]                                       # (bt*Sp, D) f32

    # ---------------- multi-head self-attention ----------------
    y = _layernorm(x, ln1g_ref[0], ln1b_ref[0]).astype(bf)
    qkv = jnp.dot(y, wqkv_ref[0],
                  preferred_element_type=f32) + bqkv_ref[0]     # (bt*Sp, 3D)
    qkv = qkv.reshape(bt, seq_pad, 3 * D)

    # additive key mask for padded sequence positions (computed once, hoisted)
    if seq_pad > seq_real:
        col = jax.lax.broadcasted_iota(jnp.int32, (seq_pad, seq_pad), 1)
        attn_bias = jnp.where(col < seq_real, 0.0, -1e30).astype(f32)
    else:
        attn_bias = None

    # Static loop over heads: single-batch-dim dot_generals (flash-attn style),
    # no axis-0 concats, scores buffer only (bt, Sp, Sp) per head.
    ctx_heads = []
    for h in range(H):
        q_h = (qkv[:, :, h * dh:(h + 1) * dh] * scale).astype(bf)
        k_h = qkv[:, :, D + h * dh:D + (h + 1) * dh].astype(bf)
        v_h = qkv[:, :, 2 * D + h * dh:2 * D + (h + 1) * dh].astype(bf)
        s = jax.lax.dot_general(q_h, k_h, (((2,), (2,)), ((0,), (0,))),
                                preferred_element_type=f32)      # (bt,Sp,Sp)
        if attn_bias is not None:
            s = s + attn_bias
        s = s - jnp.max(s, axis=-1, keepdims=True)
        e = jnp.exp(s)
        a = e * pl.reciprocal(jnp.sum(e, axis=-1, keepdims=True), approx=True)
        ctx_heads.append(
            jax.lax.dot_general(a.astype(bf), v_h, (((2,), (1,)), ((0,), (0,))),
                                preferred_element_type=f32))     # (bt,Sp,dh)

    # one lane-axis join, then ONE fused K=D output projection (full MXU depth)
    ctx = jnp.concatenate(ctx_heads, axis=-1).reshape(bt * seq_pad, D)
    attn = jnp.dot(ctx.astype(bf), wout_ref[0],
                   preferred_element_type=f32) + bout_ref[0]
    x = x + attn

    # ---------------- MLP (Linear -> GELU -> Linear), chunked over M ----------
    y2 = _layernorm(x, ln2g_ref[0], ln2b_ref[0]).astype(bf)
    h2 = jnp.zeros((bt * seq_pad, D), f32)
    for c in range(n_mc):
        w1c = w1_ref[0, :, c * mc:(c + 1) * mc]          # (D, mc)  bf16
        b1c = b1_ref[0, :, c * mc:(c + 1) * mc]          # (1, mc)
        h1c = jnp.dot(y2, w1c, preferred_element_type=f32) + b1c
        h1c = _gelu_exact(h1c).astype(bf)
        w2c = w2_ref[0, c * mc:(c + 1) * mc, :]          # (mc, D)  bf16
        h2 = h2 + jnp.dot(h1c, w2c, preferred_element_type=f32)
    x = x + h2 + b2_ref[0]

    x_sc[...] = x

    # final LayerNorm on the class rows only, written after the last layer
    @pl.when(l == num_layers - 1)
    def _():
        cls_rows = x.reshape(bt, seq_pad, D)[:, 0:1, :]          # (bt,1,D)
        o_ref[...] = _layernorm(cls_rows, lnfg_ref[...], lnfb_ref[...])


# ----------------------------------------------------------------------------
# VMEM budgeting helpers
# ----------------------------------------------------------------------------
def _pick_vmem_limit():
    try:
        cap = int(pltpu.get_tpu_info().vmem_capacity_bytes)
    except Exception:
        cap = 64 * 1024 * 1024          # conservative (v7x per-TC size)
    # ~75% of physical, capped at 100 MiB (v5e/v6e guidance from the review).
    return int(min(100 * 1024 * 1024, (cap * 3) // 4))


def _pick_batch_tile(requested, B, Sp, D, M, mc, vmem_limit):
    # Per-layer weights (bf16), x2 for BlockSpec double-buffering.
    w_bytes = 2 * 2 * (D * 3 * D + D * D + D * M + M * D)
    # Rough per-image activation footprint: f32 residual + qkv + attn/h2 accum,
    # bf16 casts, one (Sp, Sp) f32 score/prob pair, one (Sp, mc) f32 h1 chunk.
    act_per_b = Sp * (4 * D + 4 * 3 * D + 2 * 3 * D + 4 * D + 4 * mc) \
        + 2 * 4 * Sp * Sp
    budget = vmem_limit - w_bytes - (2 << 20)
    bt = max(1, min(requested, B, budget // max(act_per_b, 1)))
    # NOTE (v7x): for best 2-TensorCore utilisation, prefer a bt such that
    # ceil(B / bt) is even; weight re-streaming cost per extra batch block must
    # be weighed against that, so it is left to the caller via `batch_tile`.
    return int(bt)


# ----------------------------------------------------------------------------
# Wrapper
# ----------------------------------------------------------------------------
def vit_forward(x, params, *, patch_size, num_layers, num_heads,
                hidden_dim, mlp_dim, batch_tile=4, mlp_chunk=None):
    assert hidden_dim % num_heads == 0, "hidden_dim must be divisible by heads"
    batch = x.shape[:-3]
    x = x.reshape((-1,) + x.shape[-3:])
    B, C, Himg, Wimg = x.shape
    p = patch_size
    assert Himg % p == 0 and Wimg % p == 0, "image indivisible by patch size"
    nh, nw = Himg // p, Wimg // p
    S0 = nh * nw
    P = C * p * p
    S = S0 + 1
    Sp = ((S + 7) // 8) * 8              # pad sequence to a sublane multiple
    D = hidden_dim
    M = mlp_dim
    L = num_layers
    bf = jnp.bfloat16

    if mlp_chunk is None:
        mlp_chunk = M if M <= 1024 else 1024
    if M % mlp_chunk != 0:
        mlp_chunk = M

    vmem_limit = _pick_vmem_limit()
    Bt = _pick_batch_tile(batch_tile, B, Sp, D, M, mlp_chunk, vmem_limit)
    Bpad = pl.cdiv(B, Bt) * Bt

    # ---- unfold NCHW image into (B, S0, C*p*p) patch rows (layout glue) ----
    patches = (x.reshape(B, C, nh, p, nw, p)
                .transpose(0, 2, 4, 1, 3, 5)
                .reshape(B, S0, P)).astype(bf)
    if Bpad != B:
        patches = jnp.pad(patches, ((0, Bpad - B), (0, 0), (0, 0)))

    cls = params["class_token"].reshape(1, D)
    pos_cls = params["pos"][0:1]          # (1, D)
    pos_patch = params["pos"][1:]         # (S0, D)

    # ---- patch embedding + token assembly (fused) ----
    pe_kern = functools.partial(patch_embed_kernel, bt=Bt, seq0=S0, seq_pad=Sp)
    tokens = pl.pallas_call(
        pe_kern,
        grid=(Bpad // Bt,),
        in_specs=[pl.BlockSpec((Bt, S0, P), lambda b: (b, 0, 0)),
                  pl.BlockSpec((P, D), lambda b: (0, 0)),
                  pl.BlockSpec((1, D), lambda b: (0, 0)),
                  pl.BlockSpec((1, D), lambda b: (0, 0)),
                  pl.BlockSpec((1, D), lambda b: (0, 0)),
                  pl.BlockSpec((S0, D), lambda b: (0, 0))],
        out_specs=pl.BlockSpec((Bt, Sp, D), lambda b: (b, 0, 0)),
        out_shape=jax.ShapeDtypeStruct((Bpad, Sp, D), bf),
        compiler_params=pltpu.CompilerParams(
            dimension_semantics=("parallel",),
            vmem_limit_bytes=vmem_limit),
    )(patches, params["w_patch"].astype(bf), params["b_patch"],
      cls, pos_cls, pos_patch)

    # ---- transformer encoder ----
    # NOTE: per-layer weights are re-streamed once per batch block; for very
    # large B a layer-outer / batch-inner layout with the residual stream
    # round-tripping HBM (input_output_aliases) would cut weight traffic.
    enc_kern = functools.partial(encoder_layer_kernel, num_heads=num_heads,
                                 seq_pad=Sp, seq_real=S, bt=Bt,
                                 mlp_chunk=mlp_chunk)

    def per_layer(shape):
        nd = len(shape)
        return pl.BlockSpec((1,) + shape[1:],
                            lambda b, l, nd=nd: (l,) + (0,) * (nd - 1))

    in_specs = [
        pl.BlockSpec((Bt, Sp, D), lambda b, l: (b, 0, 0)),      # tokens
        per_layer((L, 1, D)), per_layer((L, 1, D)),             # ln1 g/b
        per_layer((L, D, 3 * D)), per_layer((L, 1, 3 * D)),     # qkv proj
        per_layer((L, D, D)), per_layer((L, 1, D)),             # out proj
        per_layer((L, 1, D)), per_layer((L, 1, D)),             # ln2 g/b
        per_layer((L, D, M)), per_layer((L, 1, M)),             # mlp fc1
        per_layer((L, M, D)), per_layer((L, 1, D)),             # mlp fc2
        pl.BlockSpec((1, D), lambda b, l: (0, 0)),              # final ln g
        pl.BlockSpec((1, D), lambda b, l: (0, 0)),              # final ln b
    ]

    out = pl.pallas_call(
        enc_kern,
        grid=(Bpad // Bt, L),
        in_specs=in_specs,
        out_specs=pl.BlockSpec((Bt, 1, D), lambda b, l: (b, 0, 0)),
        out_shape=jax.ShapeDtypeStruct((Bpad, 1, D), jnp.float32),
        scratch_shapes=[pltpu.VMEM((Bt * Sp, D), jnp.float32)],
        compiler_params=pltpu.CompilerParams(
            dimension_semantics=("parallel", "arbitrary"),
            vmem_limit_bytes=vmem_limit),
    )(tokens,
      params["ln1_g"], params["ln1_b"],
      params["wqkv"].astype(bf), params["bqkv"],
      params["wout"].astype(bf), params["bout"],
      params["ln2_g"], params["ln2_b"],
      params["w1"].astype(bf), params["b1"],
      params["w2"].astype(bf), params["b2"],
      params["lnf_g"], params["lnf_b"])

    return out[:B, 0, :].reshape(*batch, D)


# ----------------------------------------------------------------------------
# Pure-JAX f32 reference (module math, exact GELU) for verification
# ----------------------------------------------------------------------------
def vit_reference(x, params, *, patch_size, num_layers, num_heads,
                  hidden_dim, mlp_dim):
    batch = x.shape[:-3]
    x = x.reshape((-1,) + x.shape[-3:])
    B, C, Himg, Wimg = x.shape
    p = patch_size
    nh, nw = Himg // p, Wimg // p
    D = hidden_dim
    H = num_heads
    dh = D // H

    patches = (x.reshape(B, C, nh, p, nw, p)
                .transpose(0, 2, 4, 1, 3, 5)
                .reshape(B, nh * nw, C * p * p)).astype(jnp.float32)
    emb = patches @ params["w_patch"] + params["b_patch"]
    cls = jnp.broadcast_to(params["class_token"], (B, 1, D))
    xc = jnp.concatenate([cls, emb], axis=1) + params["pos"][None]

    def ln(v, g, b):
        mu = v.mean(-1, keepdims=True)
        var = ((v - mu) ** 2).mean(-1, keepdims=True)
        return (v - mu) / jnp.sqrt(var + EPS) * g + b

    for l in range(num_layers):
        y = ln(xc, params["ln1_g"][l], params["ln1_b"][l])
        qkv = y @ params["wqkv"][l] + params["bqkv"][l]
        q, k, v = qkv[..., :D], qkv[..., D:2 * D], qkv[..., 2 * D:]
        q = q.reshape(B, -1, H, dh).transpose(0, 2, 1, 3)
        k = k.reshape(B, -1, H, dh).transpose(0, 2, 1, 3)
        v = v.reshape(B, -1, H, dh).transpose(0, 2, 1, 3)
        s = jnp.einsum('bhqd,bhkd->bhqk', q, k) / jnp.sqrt(float(dh))
        a = jax.nn.softmax(s, axis=-1)
        ctx = jnp.einsum('bhqk,bhkd->bhqd', a, v).transpose(0, 2, 1, 3).reshape(B, -1, D)
        xc = xc + (ctx @ params["wout"][l] + params["bout"][l])

        y = ln(xc, params["ln2_g"][l], params["ln2_b"][l])
        y = y @ params["w1"][l] + params["b1"][l]
        y = jax.nn.gelu(y, approximate=False)
        y = y @ params["w2"][l] + params["b2"][l]
        xc = xc + y

    xc = ln(xc, params["lnf_g"], params["lnf_b"])
    return xc[:, 0].reshape(*batch, D)


# ----------------------------------------------------------------------------
# Deterministic parameter construction (synthetic weights, module shapes)
# ----------------------------------------------------------------------------
def make_params(key, *, image_size, in_channels, patch_size, num_layers,
                num_heads, hidden_dim, mlp_dim):
    p = patch_size
    D = hidden_dim
    M = mlp_dim
    L = num_layers
    C = in_channels
    S = (image_size // p) ** 2 + 1
    fan_in = C * p * p

    keys = jax.random.split(key, 16)
    f32 = jnp.float32

    conv_w = jax.random.normal(keys[0], (D, C, p, p), f32) * math.sqrt(1.0 / fan_in)
    params = {
        # conv_proj (as a flat matmul): weight flattened (C*p*p, D), bias zeros
        "w_patch": conv_w.reshape(D, C * p * p).T,
        "b_patch": jnp.zeros((1, D), f32),
        # class token is zero-initialized in the module
        "class_token": jnp.zeros((1, 1, D), f32),
        # positional embedding ~ N(0, 0.02)
        "pos": jax.random.normal(keys[1], (S, D), f32) * 0.02,
        # per-layer parameters, stacked along leading L axis
        "ln1_g": jnp.ones((L, 1, D), f32),
        "ln1_b": jnp.zeros((L, 1, D), f32),
        "wqkv": jax.random.normal(keys[2], (L, D, 3 * D), f32) * 0.05,
        "bqkv": jax.random.normal(keys[3], (L, 1, 3 * D), f32) * 0.02,
        "wout": jax.random.normal(keys[4], (L, D, D), f32) * 0.05,
        "bout": jax.random.normal(keys[5], (L, 1, D), f32) * 0.02,
        "ln2_g": jnp.ones((L, 1, D), f32),
        "ln2_b": jnp.zeros((L, 1, D), f32),
        "w1": jax.random.normal(keys[6], (L, D, M), f32) * 0.05,
        "b1": jax.random.normal(keys[7], (L, 1, M), f32) * 0.02,
        "w2": jax.random.normal(keys[8], (L, M, D), f32) * 0.05,
        "b2": jax.random.normal(keys[9], (L, 1, D), f32) * 0.02,
        # final encoder LayerNorm
        "lnf_g": jnp.ones((1, D), f32),
        "lnf_b": jnp.zeros((1, D), f32),
    }
    return params


if __name__ == "__main__":
    # Small, module-consistent configuration (lane-aligned hidden dim).
    image_size = 16
    in_channels = 4
    patch_size = 4
    num_layers = 2
    num_heads = 4
    hidden_dim = 128
    mlp_dim = 256
    batch_size = 4

    cfg = dict(patch_size=patch_size, num_layers=num_layers,
               num_heads=num_heads, hidden_dim=hidden_dim, mlp_dim=mlp_dim)

    x = jax.random.normal(jax.random.PRNGKey(0),
                          (batch_size, in_channels, image_size, image_size),
                          jnp.float32)
    params = make_params(jax.random.PRNGKey(1), image_size=image_size,
                         in_channels=in_channels, **cfg)

    # batch_tile=2 -> two batch blocks (exercises the batch pipeline and keeps
    # the "parallel" axis even for v7x); mlp_chunk=128 exercises M-chunking.
    out = vit_forward(x, params, batch_tile=2, mlp_chunk=128, **cfg)
    out = jax.block_until_ready(out)

    ref = jax.block_until_ready(vit_reference(x, params, **cfg))

    assert out.shape == (batch_size, hidden_dim), out.shape
    assert not bool(jnp.any(jnp.isnan(out)))
    # bf16 matmuls + approx softmax reciprocal vs f32 reference -> loose tol
    err = float(jnp.max(jnp.abs(out - ref)))
    assert err < 5e-2, f"max abs err = {err}"

    print("KERNEL_OK")
</pallas_src>

<mosaic_0001>
module attributes {stable_mosaic.version = 11 : i64} {
  func.func @patch_embed_kernel(%arg0: i32, %arg1: memref<2x16x64xbf16, #tpu.memory_space<vmem>>, %arg2: memref<64x128xbf16, #tpu.memory_space<vmem>>, %arg3: memref<1x128xf32, #tpu.memory_space<vmem>>, %arg4: memref<1x128xf32, #tpu.memory_space<vmem>>, %arg5: memref<1x128xf32, #tpu.memory_space<vmem>>, %arg6: memref<16x128xf32, #tpu.memory_space<vmem>>, %arg7: memref<2x24x128xbf16, #tpu.memory_space<vmem>>) attributes {dimension_semantics = [#tpu.dimension_semantics<parallel>], iteration_bounds = array<i64: 2>, scalar_prefetch = 0 : i64, scratch_operands = 0 : i64, tpu.core_type = #tpu.core_type<tc>, window_params = [{transform_indices = @transform_0, window_bounds = array<i64: 2, 16, 64>}, {pipeline_mode = #tpu.pipeline_mode<synchronous>, transform_indices = @transform_1, window_bounds = array<i64: 64, 128>}, {pipeline_mode = #tpu.pipeline_mode<synchronous>, transform_indices = @transform_2, window_bounds = array<i64: 1, 128>}, {pipeline_mode = #tpu.pipeline_mode<synchronous>, transform_indices = @transform_3, window_bounds = array<i64: 1, 128>}, {pipeline_mode = #tpu.pipeline_mode<synchronous>, transform_indices = @transform_4, window_bounds = array<i64: 1, 128>}, {pipeline_mode = #tpu.pipeline_mode<synchronous>, transform_indices = @transform_5, window_bounds = array<i64: 16, 128>}, {transform_indices = @transform_6, window_bounds = array<i64: 2, 24, 128>}]} {
    %c0 = arith.constant 0 : index
    %c0_0 = arith.constant 0 : index
    %c0_1 = arith.constant 0 : index
    %0 = vector.load %arg1[%c0, %c0_0, %c0_1] : memref<2x16x64xbf16, #tpu.memory_space<vmem>>, vector<2x16x64xbf16>
    %1 = vector.shape_cast %0 : vector<2x16x64xbf16> to vector<32x64xbf16>
    %c0_2 = arith.constant 0 : index
    %c0_3 = arith.constant 0 : index
    %2 = vector.load %arg2[%c0_2, %c0_3] : memref<64x128xbf16, #tpu.memory_space<vmem>>, vector<64x128xbf16>
    %cst = arith.constant dense<0.000000e+00> : vector<32x128xf32>
    %3 = tpu.matmul %1, %2, %cst {dimension_numbers = #tpu.dot_dimension_numbers<[1], [0], [0], [1], [0, 0, 1, 1], [], []>} : vector<32x64xbf16>, vector<64x128xbf16>, vector<32x128xf32> -> vector<32x128xf32>
    %c0_4 = arith.constant 0 : index
    %c0_5 = arith.constant 0 : index
    %4 = vector.load %arg3[%c0_4, %c0_5] : memref<1x128xf32, #tpu.memory_space<vmem>>, vector<1x128xf32>
    %5 = vector.broadcast %4 : vector<1x128xf32> to vector<32x128xf32>
    %6 = arith.addf %3, %5 : vector<32x128xf32>
    %7 = vector.shape_cast %6 : vector<32x128xf32> to vector<2x16x128xf32>
    %c0_6 = arith.constant 0 : index
    %c0_7 = arith.constant 0 : index
    %8 = vector.load %arg6[%c0_6, %c0_7] : memref<16x128xf32, #tpu.memory_space<vmem>>, vector<16x128xf32>
    %9 = vector.shape_cast %8 : vector<16x128xf32> to vector<1x16x128xf32>
    %10 = vector.broadcast %9 : vector<1x16x128xf32> to vector<2x16x128xf32>
    %11 = arith.addf %7, %10 : vector<2x16x128xf32>
    %c0_8 = arith.constant 0 : index
    %c0_9 = arith.constant 0 : index
    %12 = vector.load %arg4[%c0_8, %c0_9] : memref<1x128xf32, #tpu.memory_space<vmem>>, vector<1x128xf32>
    %c0_10 = arith.constant 0 : index
    %c0_11 = arith.constant 0 : index
    %13 = vector.load %arg5[%c0_10, %c0_11] : memref<1x128xf32, #tpu.memory_space<vmem>>, vector<1x128xf32>
    %14 = arith.addf %12, %13 : vector<1x128xf32>
    %cst_12 = arith.constant 0.000000e+00 : bf16
    %15 = vector.broadcast %cst_12 : bf16 to vector<2x7x128xbf16>
    %c0_13 = arith.constant 0 : index
    %c17 = arith.constant 17 : index
    %c0_14 = arith.constant 0 : index
    %16 = vector.load %arg7[%c0_13, %c17, %c0_14] : memref<2x24x128xbf16, #tpu.memory_space<vmem>>, vector<2x7x128xbf16>
    tpu.vector_store %arg7[%c0_13, %c17, %c0_14], %15 {strides = array<i32>} : memref<2x24x128xbf16, #tpu.memory_space<vmem>>, vector<2x7x128xbf16>,
    %17 = vector.shape_cast %14 : vector<1x128xf32> to vector<1x1x128xf32>
    %18 = vector.shape_cast %17 : vector<1x1x128xf32> to vector<1x1x128xf32>
    %19 = vector.broadcast %18 : vector<1x1x128xf32> to vector<2x1x128xf32>
    %20 = arith.truncf %19 : vector<2x1x128xf32> to vector<2x1x128xbf16>
    %c0_15 = arith.constant 0 : index
    %c0_16 = arith.constant 0 : index
    %c0_17 = arith.constant 0 : index
    %21 = vector.load %arg7[%c0_15, %c0_16, %c0_17] : memref<2x24x128xbf16, #tpu.memory_space<vmem>>, vector<2x1x128xbf16>
    tpu.vector_store %arg7[%c0_15, %c0_16, %c0_17], %20 {strides = array<i32>} : memref<2x24x128xbf16, #tpu.memory_space<vmem>>, vector<2x1x128xbf16>,
    %22 = arith.truncf %11 : vector<2x16x128xf32> to vector<2x16x128xbf16>
    %c0_18 = arith.constant 0 : index
    %c1 = arith.constant 1 : index
    %c0_19 = arith.constant 0 : index
    %23 = vector.load %arg7[%c0_18, %c1, %c0_19] : memref<2x24x128xbf16, #tpu.memory_space<vmem>>, vector<2x16x128xbf16>
    tpu.vector_store %arg7[%c0_18, %c1, %c0_19], %22 {strides = array<i32>} : memref<2x24x128xbf16, #tpu.memory_space<vmem>>, vector<2x16x128xbf16>,
    return
  }
  func.func @transform_0(%arg0: i32) -> (i32, i32, i32) {
    %c0_i32 = arith.constant 0 : i32
    %c0_i32_0 = arith.constant 0 : i32
    %c0_i32_1 = arith.constant 0 : i32
    return %arg0, %c0_i32, %c0_i32_0 : i32, i32, i32
  }
  func.func @transform_1(%arg0: i32) -> (i32, i32) {
    %c0_i32 = arith.constant 0 : i32
    %c0_i32_0 = arith.constant 0 : i32
    %c0_i32_1 = arith.constant 0 : i32
    return %c0_i32, %c0_i32_0 : i32, i32
  }
  func.func @transform_2(%arg0: i32) -> (i32, i32) {
    %c0_i32 = arith.constant 0 : i32
    %c0_i32_0 = arith.constant 0 : i32
    %c0_i32_1 = arith.constant 0 : i32
    return %c0_i32, %c0_i32_0 : i32, i32
  }
  func.func @transform_3(%arg0: i32) -> (i32, i32) {
    %c0_i32 = arith.constant 0 : i32
    %c0_i32_0 = arith.constant 0 : i32
    %c0_i32_1 = arith.constant 0 : i32
    return %c0_i32, %c0_i32_0 : i32, i32
  }
  func.func @transform_4(%arg0: i32) -> (i32, i32) {
    %c0_i32 = arith.constant 0 : i32
    %c0_i32_0 = arith.constant 0 : i32
    %c0_i32_1 = arith.constant 0 : i32
    return %c0_i32, %c0_i32_0 : i32, i32
  }
  func.func @transform_5(%arg0: i32) -> (i32, i32) {
    %c0_i32 = arith.constant 0 : i32
    %c0_i32_0 = arith.constant 0 : i32
    %c0_i32_1 = arith.constant 0 : i32
    return %c0_i32, %c0_i32_0 : i32, i32
  }
  func.func @transform_6(%arg0: i32) -> (i32, i32, i32) {
    %c0_i32 = arith.constant 0 : i32
    %c0_i32_0 = arith.constant 0 : i32
    %c0_i32_1 = arith.constant 0 : i32
    return %arg0, %c0_i32, %c0_i32_0 : i32, i32, i32
  }
}

</mosaic_0001>

<llo_original>
// kernel: tpu_custom_call.1
$region0: #{tpu_custom_call.1}
  #allocation0 [shape = 'u32[]', space=smem, size = 0x4, offset = 0x4, fixed_abs, tag = 'smem constant byte address 0x4 - core index']
  #allocation1 [shape = 'u32[72,128]{1,0:T(1,128)}', space=vmem, size = 0x9000, scoped, tag = 'internal scratch']
  %s0 = inlined_call_operand.hbm [shape: bf16[4,16,64], index: 0, kind: input, shape index: {}]
  %s1 = inlined_call_operand.hbm [shape: bf16[64,128], index: 1, kind: input, shape index: {}]
  %s2 = inlined_call_operand.vmem [shape: f32[1,128], index: 2, kind: input, shape index: {}]
  %s3 = inlined_call_operand.vmem [shape: f32[1,128], index: 3, kind: input, shape index: {}]
  %s4 = inlined_call_operand.vmem [shape: f32[1,128], index: 4, kind: input, shape index: {}]
  %s5 = inlined_call_operand.hbm [shape: f32[16,128], index: 5, kind: input, shape index: {}]
  %s6 = inlined_call_operand.hbm [shape: bf16[4,24,128], index: 6, kind: output, shape index: {}]
  %s7 = sld [smem:[#allocation0]]
  $region69: #{tpu_custom_call.1} parent=0
    _
  %s9 = ssub.s32 1, %s7
  %s10 = scalar_select 0, %s9, %s7
  $region1: #{tpu_custom_call.1} parent=0
    #allocation2 [shape = 'u8[16384]{0}', space=vmem, size = 0x4000, scoped, tag = 'input window, operand 0']
    #allocation3 [shape = 's32[2]{0}', space=sflag, size = 0x8, scoped, tag = 'scoped memory for tpu_custom_call.1']
    #allocation4 [shape = 's32[2]{0}', space=sflag, size = 0x8, scoped, tag = 'scoped memory for tpu_custom_call.1']
    #allocation5 [shape = 'u8[16384]{0}', space=vmem, size = 0x4000, scoped, tag = 'input window, operand 1, single buffered']
    #allocation6 [shape = 's32[1]{0}', space=sflag, size = 0x4, scoped, tag = 'scoped memory for tpu_custom_call.1']
    #allocation7 [shape = 'u8[8192]{0}', space=vmem, size = 0x2000, scoped, tag = 'input window, operand 5, single buffered']
    #allocation8 [shape = 'u8[24576]{0}', space=vmem, size = 0x6000, scoped, tag = 'output window, operand 0']
    %11 = vsyncpa [#allocation3], 0
    %s12 = scalar_lea.sflag [#allocation3], 1
    %13 = vsyncpa %s12, 0
    %14 = vsyncpa [#allocation6], 0
    %15 = vsyncpa [#allocation4], 0
    %s16 = scalar_lea.sflag [#allocation4], 1
    %17 = vsyncpa %s16, 0
    loop: start=0, step=1, limit=4
    $region2: #{tpu_custom_call.1} parent=1 // loop_pre_header
      _
    $region3: #{tpu_custom_call.1} parent=1 // loop_header
      %s19 = sphi 0, %s23
      %p20 = scmp.ge.s32.totalorder %s19, 4
      %s29 = sphi 0, %s31
      %s32 = sphi 0, %s29
      %s33 = sphi 0, %s32
      %s49 = sphi 0, %s33
      %s53 = sphi 0, %s53
      %s55 = sphi 0, %s53
      %s56 = sphi 0, %s55
      %s70 = sphi 0, %s56
      %s74 = sphi 0, %s74
      %s76 = sphi 0, %s74
      %s77 = sphi 0, %s76
      %s91 = sphi 0, %s77
      %s95 = sphi 0, %s95
      %s97 = sphi 0, %s95
      %s98 = sphi 0, %s97
      %s112 = sphi 0, %s98
      %s116 = sphi 0, %s116
      %s118 = sphi 0, %s116
      %s119 = sphi 0, %s118
      %s133 = sphi 0, %s119
      %s137 = sphi 0, %s137
      %s139 = sphi 0, %s137
      %s140 = sphi 0, %s139
      %s154 = sphi 0, %s140
      %s160 = sphi 0, %s162
      %s163 = sphi 0, %s160
      %s164 = sphi 0, %s163
      %s180 = sphi 0, %s164
    $region4: #{tpu_custom_call.1} parent=1 // loop_header_branch
      %22 = sbr.rel (%p20) target = $region8
    $region5: #{tpu_custom_call.1} parent=1 // loop_body
      %s24 = ssub.s32 %s19, 1
      %s25 = ssub.s32 %s19, 2
      %s26 = sadd.s32 %s19, 1
      %s27 = ssub.s32 %s19, %s26
      %p28 = scmp.eq.s32.totalorder %s27, 0
      %s30 = sadd.s32 %s29, 1
      %s31 = scalar_select %p28, %s29, %s30
      %p34 = pneg %p28
      %p35 = scmp.eq.s32.totalorder %s19, 1
      %p36 = por %p34, %p35
      %p37 = scmp.ne.s32.totalorder %s29, %s32
      %p38 = scmp.eq.s32.totalorder %s19, 0
      %p39 = por %p37, %p38
      %p40 = scmp.ne.s32.totalorder %s29, %s32
      %p41 = scmp.eq.s32.totalorder %s24, 1
      %p42 = por %p40, %p41
      %p43 = scmp.ne.s32.totalorder %s32, %s33
      %p44 = scmp.eq.s32.totalorder %s24, 0
      %p45 = por %p43, %p44
      %p46 = scmp.ne.s32.totalorder %s32, %s33
      %p47 = scmp.eq.s32.totalorder %s25, 1
      %p48 = por %p46, %p47
      %p50 = scmp.ne.s32.totalorder %s33, %s49
      %p51 = scmp.eq.s32.totalorder %s25, 0
      %p52 = por %p50, %p51
      %s54 = sadd.s32 %s53, 1
      %p57 = scmp.eq.s32.totalorder %s19, 1
      %p58 = scmp.ne.s32.totalorder %s53, %s55
      %p59 = scmp.eq.s32.totalorder %s19, 0
      %p60 = por %p58, %p59
      %p61 = scmp.ne.s32.totalorder %s53, %s55
      %p62 = scmp.eq.s32.totalorder %s24, 1
      %p63 = por %p61, %p62
      %p64 = scmp.ne.s32.totalorder %s55, %s56
      %p65 = scmp.eq.s32.totalorder %s24, 0
      %p66 = por %p64, %p65
      %p67 = scmp.ne.s32.totalorder %s55, %s56
      %p68 = scmp.eq.s32.totalorder %s25, 1
      %p69 = por %p67, %p68
      %p71 = scmp.ne.s32.totalorder %s56, %s70
      %p72 = scmp.eq.s32.totalorder %s25, 0
      %p73 = por %p71, %p72
      %s75 = sadd.s32 %s74, 1
      %p78 = scmp.eq.s32.totalorder %s19, 1
      %p79 = scmp.ne.s32.totalorder %s74, %s76
      %p80 = scmp.eq.s32.totalorder %s19, 0
      %p81 = por %p79, %p80
      %p82 = scmp.ne.s32.totalorder %s74, %s76
      %p83 = scmp.eq.s32.totalorder %s24, 1
      %p84 = por %p82, %p83
      %p85 = scmp.ne.s32.totalorder %s76, %s77
      %p86 = scmp.eq.s32.totalorder %s24, 0
      %p87 = por %p85, %p86
      %p88 = scmp.ne.s32.totalorder %s76, %s77
      %p89 = scmp.eq.s32.totalorder %s25, 1
      %p90 = por %p88, %p89
      %p92 = scmp.ne.s32.totalorder %s77, %s91
      %p93 = scmp.eq.s32.totalorder %s25, 0
      %p94 = por %p92, %p93
      %s96 = sadd.s32 %s95, 1
      %p99 = scmp.eq.s32.totalorder %s19, 1
      %p100 = scmp.ne.s32.totalorder %s95, %s97
      %p101 = scmp.eq.s32.totalorder %s19, 0
      %p102 = por %p100, %p101
      %p103 = scmp.ne.s32.totalorder %s95, %s97
      %p104 = scmp.eq.s32.totalorder %s24, 1
      %p105 = por %p103, %p104
      %p106 = scmp.ne.s32.totalorder %s97, %s98
      %p107 = scmp.eq.s32.totalorder %s24, 0
      %p108 = por %p106, %p107
      %p109 = scmp.ne.s32.totalorder %s97, %s98
      %p110 = scmp.eq.s32.totalorder %s25, 1
      %p111 = por %p109, %p110
      %p113 = scmp.ne.s32.totalorder %s98, %s112
      %p114 = scmp.eq.s32.totalorder %s25, 0
      %p115 = por %p113, %p114
      %s117 = sadd.s32 %s116, 1
      %p120 = scmp.eq.s32.totalorder %s19, 1
      %p121 = scmp.ne.s32.totalorder %s116, %s118
      %p122 = scmp.eq.s32.totalorder %s19, 0
      %p123 = por %p121, %p122
      %p124 = scmp.ne.s32.totalorder %s116, %s118
      %p125 = scmp.eq.s32.totalorder %s24, 1
      %p126 = por %p124, %p125
      %p127 = scmp.ne.s32.totalorder %s118, %s119
      %p128 = scmp.eq.s32.totalorder %s24, 0
      %p129 = por %p127, %p128
      %p130 = scmp.ne.s32.totalorder %s118, %s119
      %p131 = scmp.eq.s32.totalorder %s25, 1
      %p132 = por %p130, %p131
      %p134 = scmp.ne.s32.totalorder %s119, %s133
      %p135 = scmp.eq.s32.totalorder %s25, 0
      %p136 = por %p134, %p135
      %s138 = sadd.s32 %s137, 1
      %p141 = scmp.eq.s32.totalorder %s19, 1
      %p142 = scmp.ne.s32.totalorder %s137, %s139
      %p143 = scmp.eq.s32.totalorder %s19, 0
      %p144 = por %p142, %p143
      %p145 = scmp.ne.s32.totalorder %s137, %s139
      %p146 = scmp.eq.s32.totalorder %s24, 1
      %p147 = por %p145, %p146
      %p148 = scmp.ne.s32.totalorder %s139, %s140
      %p149 = scmp.eq.s32.totalorder %s24, 0
      %p150 = por %p148, %p149
      %p151 = scmp.ne.s32.totalorder %s139, %s140
      %p152 = scmp.eq.s32.totalorder %s25, 1
      %p153 = por %p151, %p152
      %p155 = scmp.ne.s32.totalorder %s140, %s154
      %p156 = scmp.eq.s32.totalorder %s25, 0
      %p157 = por %p155, %p156
      %s158 = ssub.s32 %s19, %s26
      %p159 = scmp.eq.s32.totalorder %s158, 0
      %s161 = sadd.s32 %s160, 1
      %s162 = scalar_select %p159, %s160, %s161
      %p165 = pneg %p159
      %p166 = scmp.eq.s32.totalorder %s19, 1
      %p167 = por %p165, %p166
      %p168 = scmp.ne.s32.totalorder %s160, %s163
      %p169 = scmp.eq.s32.totalorder %s19, 0
      %p170 = por %p168, %p169
      %p171 = scmp.ne.s32.totalorder %s160, %s163
      %p172 = scmp.eq.s32.totalorder %s24, 1
      %p173 = por %p171, %p172
      %p174 = scmp.ne.s32.totalorder %s163, %s164
      %p175 = scmp.eq.s32.totalorder %s24, 0
      %p176 = por %p174, %p175
      %p177 = scmp.ne.s32.totalorder %s163, %s164
      %p178 = scmp.eq.s32.totalorder %s25, 1
      %p179 = por %p177, %p178
      %p181 = scmp.ne.s32.totalorder %s164, %s180
      %p182 = scmp.eq.s32.totalorder %s25, 0
      %p183 = por %p181, %p182
      %p184 = scmp.le.s32.totalorder 1, %s19
      %p185 = scmp.lt.s32.totalorder %s19, 3
      %p186 = pnand %p184, %p185
      %p187 = pneg %p186
      // Predicated region
      $region9: #{tpu_custom_call.1} parent=5 // pred_check
        _
      $region10: #{tpu_custom_call.1} parent=5 // pred_check_branch
        %189 = sbr.rel (%p186) target = $region12
      $region11: #{tpu_custom_call.1} parent=5 // pred_region
        %s190 = ssub.s32 %s19, 1
        // Predicated region
        $region13: #{tpu_custom_call.1} parent=11 // pred_check
          %p191 = pneg %p66
        $region14: #{tpu_custom_call.1} parent=11 // pred_check_branch
          %193 = sbr.rel (%p191) target = $region16
        $region15: #{tpu_custom_call.1} parent=11 // pred_region
          %195 = vsyncadd [#allocation6], 0
          %s196 = sshll.u32 %s1, 4
          %s197 = int_to_ptr.hbm [resolvable:$true] %s196
          %s198 = sshll.u32 [#allocation5], 4
          %s199 = int_to_ptr.vmem [resolvable:$true] %s198
          %204 = dma.hbm_to_vmem [thread:$0]  %s197, 512, %s199, [#allocation6], 64, 64, 4
        $region16: #{tpu_custom_call.1} parent=11 // pred_fallthru
          _
        // Predicated region
        $region17: #{tpu_custom_call.1} parent=11 // pred_check
          %p205 = pneg %p87
        $region18: #{tpu_custom_call.1} parent=11 // pred_check_branch
          %207 = sbr.rel (%p205) target = $region20
        $region19: #{tpu_custom_call.1} parent=11 // pred_region
          _
        $region20: #{tpu_custom_call.1} parent=11 // pred_fallthru
          _
        // Predicated region
        $region21: #{tpu_custom_call.1} parent=11 // pred_check
          %p208 = pneg %p108
        $region22: #{tpu_custom_call.1} parent=11 // pred_check_branch
          %210 = sbr.rel (%p208) target = $region24
        $region23: #{tpu_custom_call.1} parent=11 // pred_region
          _
        $region24: #{tpu_custom_call.1} parent=11 // pred_fallthru
          _
        // Predicated region
        $region25: #{tpu_custom_call.1} parent=11 // pred_check
          %p211 = pneg %p129
        $region26: #{tpu_custom_call.1} parent=11 // pred_check_branch
          %213 = sbr.rel (%p211) target = $region28
        $region27: #{tpu_custom_call.1} parent=11 // pred_region
          _
        $region28: #{tpu_custom_call.1} parent=11 // pred_fallthru
          _
        // Predicated region
        $region29: #{tpu_custom_call.1} parent=11 // pred_check
          %p214 = pneg %p150
        $region30: #{tpu_custom_call.1} parent=11 // pred_check_branch
          %216 = sbr.rel (%p214) target = $region32
        $region31: #{tpu_custom_call.1} parent=11 // pred_region
          %218 = vsyncadd [#allocation6], 0
          %s219 = sshll.u32 %s5, 4
          %s220 = int_to_ptr.hbm [resolvable:$true] %s219
          %s221 = sshll.u32 [#allocation7], 4
          %s222 = int_to_ptr.vmem [resolvable:$true] %s221
          %227 = dma.hbm_to_vmem [thread:$0]  %s220, 256, %s222, [#allocation6], 128, 128, 8
        $region32: #{tpu_custom_call.1} parent=11 // pred_fallthru
          _
      $region12: #{tpu_custom_call.1} parent=5 // pred_fallthru
        _
      %p228 = scmp.lt.s32.totalorder %s19, 2
      // Predicated region
      $region33: #{tpu_custom_call.1} parent=5 // pred_check
        %p229 = pneg %p228
      $region34: #{tpu_custom_call.1} parent=5 // pred_check_branch
        %231 = sbr.rel (%p229) target = $region36
      $region35: #{tpu_custom_call.1} parent=5 // pred_region
        // Predicated region
        $region37: #{tpu_custom_call.1} parent=35 // pred_check
          %p232 = pneg %p39
        $region38: #{tpu_custom_call.1} parent=35 // pred_check_branch
          %234 = sbr.rel (%p232) target = $region40
        $region39: #{tpu_custom_call.1} parent=35 // pred_region
          %s235 = sand.u32 %s29, 1
          %s236 = scalar_lea.sflag [#allocation3], %s235
          %s237 = sand.u32 %s29, 1
          %s238 = smul.addr %s237, 16
          %s239 = scalar_lea.vmem [#allocation2], %s238
          %s240 = smul.u32 2, %s19
          %242 = vsyncadd %s236, 0
          %s243 = smul.addr %s240, 2
          %s244 = smul.addr %s243, 4
          %s245 = scalar_lea.hbm %s0, %s244
          %s246 = sshll.u32 %s245, 4
          %s247 = int_to_ptr.hbm [resolvable:$true] %s246
          %s248 = sshll.u32 %s239, 4
          %s249 = int_to_ptr.vmem [resolvable:$true] %s248
          %254 = dma.hbm_to_vmem [thread:$0]  %s247, 256, %s249, %s236, 64, 64, 4
        $region40: #{tpu_custom_call.1} parent=35 // pred_fallthru
          _
      $region36: #{tpu_custom_call.1} parent=5 // pred_fallthru
        _
      %p255 = scmp.le.s32.totalorder 1, %s19
      %p256 = scmp.lt.s32.totalorder %s19, 3
      %p257 = pnand %p255, %p256
      %p258 = pneg %p257
      // Predicated region
      $region41: #{tpu_custom_call.1} parent=5 // pred_check
        _
      $region42: #{tpu_custom_call.1} parent=5 // pred_check_branch
        %260 = sbr.rel (%p257) target = $region44
      $region43: #{tpu_custom_call.1} parent=5 // pred_region
        %s261 = ssub.s32 %s19, 1
        %s262 = sand.u32 %s32, 1
        %s263 = scalar_lea.sflag [#allocation3], %s262
        %s264 = sand.u32 %s32, 1
        %s265 = smul.addr %s264, 16
        %s266 = scalar_lea.vmem [#allocation2], %s265
        // Predicated region
        $region45: #{tpu_custom_call.1} parent=43 // pred_check
          %p267 = pneg %p45
        $region46: #{tpu_custom_call.1} parent=43 // pred_check_branch
          %269 = sbr.rel (%p267) target = $region48
        $region47: #{tpu_custom_call.1} parent=43 // pred_region
          %271 = dma.done %s263, 256
        $region48: #{tpu_custom_call.1} parent=43 // pred_fallthru
          _
        // Predicated region
        $region49: #{tpu_custom_call.1} parent=43 // pred_check
          %p272 = pneg %p66
        $region50: #{tpu_custom_call.1} parent=43 // pred_check_branch
          %274 = sbr.rel (%p272) target = $region52
        $region51: #{tpu_custom_call.1} parent=43 // pred_region
          %276 = dma.done [#allocation6], 512
        $region52: #{tpu_custom_call.1} parent=43 // pred_fallthru
          _
        // Predicated region
        $region53: #{tpu_custom_call.1} parent=43 // pred_check
          %p277 = pneg %p150
        $region54: #{tpu_custom_call.1} parent=43 // pred_check_branch
          %279 = sbr.rel (%p277) target = $region56
        $region55: #{tpu_custom_call.1} parent=43 // pred_region
          %281 = dma.done [#allocation6], 256
        $region56: #{tpu_custom_call.1} parent=43 // pred_fallthru
          _
        %s282 = sand.u32 %s32, 1
        %s283 = scalar_lea.sflag [#allocation3], %s282
        %s284 = sand.u32 %s32, 1
        %s285 = smul.addr %s284, 16
        %s286 = scalar_lea.vmem [#allocation2], %s285
        %p287 = pneg %p45
        %p288 = pneg %p42
        %p289 = pneg %p66
        %p290 = pneg %p63
        %p291 = pneg %p87
        %p292 = pneg %p84
        %p293 = pneg %p108
        %p294 = pneg %p105
        %p295 = pneg %p129
        %p296 = pneg %p126
        %p297 = pneg %p150
        %p298 = pneg %p147
        %p299 = pneg %p176
        %p300 = pneg %p173
        %s301 = sand.u32 %s163, 1
        %s302 = scalar_lea.sflag [#allocation4], %s301
        %s303 = sand.u32 %s163, 1
        %s304 = smul.addr %s303, 24
        %s305 = scalar_lea.vmem [#allocation8], %s304
        %s306 = smul.u32 2, %s24
        %s307 = smul.u32 2, %s24
        %v309 = vld [vmem:[%s266] sm:$0xf]
        %v310 = vld [vmem:[%s266 + $0x4] sm:$0xf]
        %v311 = vld [vmem:[%s266 + $0x8] sm:$0xf]
        %v312 = vld [vmem:[%s266 + $0xc] sm:$0xf]
        %v313 = vld [vmem:[#allocation5] sm:$0xf]
        %v314 = vld [vmem:[#allocation5 + $0x4] sm:$0xf]
        %v315 = vld [vmem:[#allocation5 + $0x8] sm:$0xf]
        %v316 = vld [vmem:[#allocation5 + $0xc] sm:$0xf]
        %v317 = vld [vmem:[#allocation5 + $0x10] sm:$0xf]
        %v318 = vld [vmem:[#allocation5 + $0x14] sm:$0xf]
        %v319 = vld [vmem:[#allocation5 + $0x18] sm:$0xf]
        %v320 = vld [vmem:[#allocation5 + $0x1c] sm:$0xf]
        %v321 = vld [vmem:[%s2] sm:$0x1]
        %v323 = vperm.slane %v321, 0
        %v329 = vunpack.c.l.b16 %v309
        %v330 = vunpack.c.l.b16 %v310
        %v331 = vunpack.c.l.b16 %v311
        %v332 = vunpack.c.l.b16 %v312
        %v333 = vpack.c.b16 %v330, %v329
        %v334 = vpack.c.b16 %v332, %v331
        %v343 = vunpack.c.l.b16 %v313
        %v344 = vunpack.c.l.b16 %v314
        %v345 = vunpack.c.l.b16 %v315
        %v346 = vunpack.c.l.b16 %v316
        %v347 = vunpack.c.l.b16 %v317
        %v348 = vunpack.c.l.b16 %v318
        %v349 = vunpack.c.l.b16 %v319
        %v350 = vunpack.c.l.b16 %v320
        %v351 = vpack.c.b16 %v344, %v343
        %v352 = vpack.c.b16 %v346, %v345
        %v353 = vpack.c.b16 %v348, %v347
        %v354 = vpack.c.b16 %v350, %v349
        %vm359 = vcmask 523264
        %v361 = vsel %vm359, %v333, 0
        %v364 = vsel %vm359, %v334, 0
        %366 = vmatpush.bf16.msra.mxu0 0
        %367 = vmatpush.bf16.msra.mxu0 0
        %368 = vmatpush.bf16.msra.mxu0 0
        %369 = vmatpush.bf16.msra.mxu0 0
        %370 = vmatpush.bf16.msra.mxu0 %v354
        %371 = vmatpush.bf16.msra.mxu0 %v353
        %372 = vmatpush.bf16.msra.mxu0 %v352
        %373 = vmatpush.bf16.msra.mxu0 %v351
        %374 = vmatmul.bf16.gmra.mxu0 %v361
        %v375 = vpop.f32.mrf.mxu0
        %v376 = vadd.f32 %v323, %v375
        %v377 = vpop.f32.mrf.mxu0
        %v378 = vadd.f32 %v323, %v377
        %379 = vmatmul.bf16.gmra.mxu0 %v364
        %v380 = vpop.f32.mrf.mxu0
        %v381 = vadd.f32 %v323, %v380
        %v382 = vpop.f32.mrf.mxu0
        %v383 = vadd.f32 %v323, %v382
        %384 = vdwg.mxu0
        %v385 = vld [vmem:[#allocation7] sm:$0xff]
        %v386 = vld [vmem:[#allocation7 + $0x8] sm:$0xff]
        %v387 = vadd.f32 %v376, %v385
        %v388 = vadd.f32 %v378, %v386
        %v389 = vadd.f32 %v381, %v385
        %v390 = vadd.f32 %v383, %v386
        %v391 = vld [vmem:[%s3] sm:$0x1]
        %v392 = vld [vmem:[%s4] sm:$0x1]
        %v393 = vadd.f32 %v391, %v392
        %vm394 = vcmask 1043456
        %vm395 = vsmask.f32 7938
        %vm396 = vmand %vm394, %vm395
        %v397 = vld [vmem:[%s305 + $0x8] sm:$0xf]
        %v398 = vsel %vm396, 0, %v397
        %399 = vst [vmem:[%s305 + $0x8] sm:$0xf] %v398
        %v400 = vld [vmem:[%s305 + $0x14] sm:$0xf]
        %v401 = vsel %vm396, 0, %v400
        %402 = vst [vmem:[%s305 + $0x14] sm:$0xf] %v401
        %v403 = vpack.c.bf16 %v393, %v393
        %vm404 = vcmask 1040384
        %vm405 = vsmask.f32 256
        %vm406 = vmand %vm404, %vm405
        %v407 = vld [vmem:[%s305] sm:$0x1]
        %v408 = vsel %vm406, %v403, %v407
        %409 = vst [vmem:[%s305] sm:$0x1] %v408
        %v410 = vld [vmem:[%s305 + $0xc] sm:$0x1]
        %v411 = vsel %vm406, %v403, %v410
        %412 = vst [vmem:[%s305 + $0xc] sm:$0x1] %v411
        %v413 = vpack.c.bf16 %v387, %v387
        %v414 = vpack.c.bf16 %v388, %v388
        %v415 = vpack.c.bf16 %v389, %v389
        %v416 = vpack.c.bf16 %v390, %v390
        %vm417 = vsmask.f32 4368
        %vm418 = vmor %vm405, %vm417
        %v420 = vshrl.u32 %v413, 16
        %v422 = vrot.slane %v420, 7
        %v423 = vshll.u32 %v413, 16
        %v425 = vor.u32 %v422, %v423
        %v426 = vrot.slane %v422, 4
        %v428 = vshrl.u32 %v414, 16
        %v430 = vrot.slane %v428, 7
        %v431 = vshll.u32 %v414, 16
        %v433 = vor.u32 %v430, %v431
        %v434 = vsel %vm418, %v426, %v433
        %v435 = vrot.slane %v430, 4
        %v437 = vshrl.u32 %v415, 16
        %v439 = vrot.slane %v437, 7
        %v440 = vshll.u32 %v415, 16
        %v442 = vor.u32 %v439, %v440
        %v443 = vrot.slane %v439, 4
        %v445 = vshrl.u32 %v416, 16
        %v447 = vrot.slane %v445, 7
        %v448 = vshll.u32 %v416, 16
        %v450 = vor.u32 %v447, %v448
        %v451 = vsel %vm418, %v443, %v450
        %v452 = vrot.slane %v447, 4
        %v459 = vld [vmem:[%s305] sm:$0xf]
        %v460 = vsel %vm396, %v425, %v459
        %461 = vst [vmem:[%s305] sm:$0xf] %v460
        %462 = vst [vmem:[%s305 + $0x4] sm:$0xf] %v434
        %v463 = vld [vmem:[%s305 + $0x8] sm:$0x1]
        %v464 = vsel %vm406, %v435, %v463
        %465 = vst [vmem:[%s305 + $0x8] sm:$0x1] %v464
        %v466 = vld [vmem:[%s305 + $0xc] sm:$0xf]
        %v467 = vsel %vm396, %v442, %v466
        %468 = vst [vmem:[%s305 + $0xc] sm:$0xf] %v467
        %469 = vst [vmem:[%s305 + $0x10] sm:$0xf] %v451
        %v470 = vld [vmem:[%s305 + $0x14] sm:$0x1]
        %v471 = vsel %vm406, %v452, %v470
        %472 = vst [vmem:[%s305 + $0x14] sm:$0x1] %v471
        %s473 = sand.u32 %s163, 1
        %s474 = scalar_lea.sflag [#allocation4], %s473
        %s475 = sand.u32 %s163, 1
        %s476 = smul.addr %s475, 24
        %s477 = scalar_lea.vmem [#allocation8], %s476
        // Predicated region
        $region57: #{tpu_custom_call.1} parent=43 // pred_check
          %p478 = pneg %p173
        $region58: #{tpu_custom_call.1} parent=43 // pred_check_branch
          %480 = sbr.rel (%p478) target = $region60
        $region59: #{tpu_custom_call.1} parent=43 // pred_region
          %s481 = smul.u32 2, %s24
          %483 = vsyncadd %s474, 0
          %s484 = smul.addr %s481, 3
          %s485 = smul.addr %s484, 4
          %s486 = scalar_lea.hbm %s6, %s485
          %s487 = sshll.u32 %s477, 4
          %s488 = int_to_ptr.vmem [resolvable:$true] %s487
          %s489 = sshll.u32 %s486, 4
          %s490 = int_to_ptr.hbm [resolvable:$true] %s489
          %495 = dma.vmem_to_hbm [thread:$0]  %s488, 384, %s490, %s474, 64, 64, 4
        $region60: #{tpu_custom_call.1} parent=43 // pred_fallthru
          _
      $region44: #{tpu_custom_call.1} parent=5 // pred_fallthru
        _
      %p496 = scmp.le.s32.totalorder 2, %s19
      // Predicated region
      $region61: #{tpu_custom_call.1} parent=5 // pred_check
        %p497 = pneg %p496
      $region62: #{tpu_custom_call.1} parent=5 // pred_check_branch
        %499 = sbr.rel (%p497) target = $region64
      $region63: #{tpu_custom_call.1} parent=5 // pred_region
        %s500 = ssub.s32 %s19, 2
        // Predicated region
        $region65: #{tpu_custom_call.1} parent=63 // pred_check
          %p501 = pneg %p179
        $region66: #{tpu_custom_call.1} parent=63 // pred_check_branch
          %503 = sbr.rel (%p501) target = $region68
        $region67: #{tpu_custom_call.1} parent=63 // pred_region
          %s504 = sand.u32 %s164, 1
          %s505 = scalar_lea.sflag [#allocation4], %s504
          %s506 = sand.u32 %s164, 1
          %s507 = smul.addr %s506, 24
          %s508 = scalar_lea.vmem [#allocation8], %s507
          %510 = dma.done %s505, 384
        $region68: #{tpu_custom_call.1} parent=63 // pred_fallthru
          _
      $region64: #{tpu_custom_call.1} parent=5 // pred_fallthru
        _
    $region6: #{tpu_custom_call.1} parent=1 // loop_footer
      %s23 = sadd.s32 1, %s19
    $region7: #{tpu_custom_call.1} parent=1 // loop_footer_branch
      %18 = sbr.rel target = $region3
    $region8: #{tpu_custom_call.1} parent=1 // loop_exit
      _
    %511 = vsyncpa [#allocation3], 1
    %s512 = scalar_lea.sflag [#allocation3], 1
    %513 = vsyncpa %s512, 1
    %514 = vsyncpa [#allocation6], 1
    %515 = vsyncpa [#allocation4], 1
    %s516 = scalar_lea.sflag [#allocation4], 1
    %517 = vsyncpa %s516, 1

</llo_original>
